<compile_context>
chip_gen: v5e
topology: v5e:2x2
jax: 0.10.0
libtpu: 0.0.40
codegen_flags: <defaults>
</compile_context>

<pallas_src>
import functools

import jax
import jax.numpy as jnp
from jax.experimental import pallas as pl
from jax.experimental.pallas import tpu as pltpu

LANE = 128      # vreg lane width  -> last-dim alignment target
SUBLANE = 8     # vreg sublane width -> second-to-last-dim alignment target


def _round_up(n, m):
    return ((n + m - 1) // m) * m


# ----------------------------- Pallas kernels ------------------------------ #

def _fused_mlp_kernel(*refs, num_layers, batch_pad, hidden_pad):
    """Entire forward pass in one kernel.

    refs = (x, w0, b0, ..., w_{L-1}, b_{L-1}, w_f, b_f, o)
      x:  (B_pad, In_pad)
      w*: (Fin_pad, Fout_pad)   -- pre-transposed, zero-padded
      b*: (1, Fout_pad)
      o:  (B_pad, Out_pad)
    """
    x_ref = refs[0]
    layer_refs = refs[1:1 + 2 * num_layers]
    wf_ref, bf_ref, o_ref = refs[1 + 2 * num_layers:]

    # Hidden stack (CacheOptimizedLayer + VectorizedReLU), fused; activations
    # stay in vregs/VMEM.  NOTE: mathematically dead work -- MemoryPooling below
    # discards it -- kept for op-for-op fidelity with the PyTorch module.
    # (Default matmul precision is fine: the final output is insensitive.)
    x = x_ref[...]
    for i in range(num_layers):
        w = layer_refs[2 * i][...]
        b = layer_refs[2 * i + 1][...]
        x = jnp.maximum(
            jnp.dot(x, w, preferred_element_type=jnp.float32) + b, 0.0)

    # MemoryPooling: replaces activations with a fresh zero tensor (B, hidden).
    x = jnp.zeros((batch_pad, hidden_pad), jnp.float32)

    # ParallelLayer(final_layer): chunk/DataLoader orchestration is an identity
    # over the batch dim -> plain linear.
    o = jnp.dot(x, wf_ref[...], preferred_element_type=jnp.float32) + bf_ref[...]
    o_ref[...] = o.astype(o_ref.dtype)


def _final_bias_kernel(bf_ref, o_ref, *, batch_pad, out_pad):
    """Elided path: zeros @ W_f + b_f == broadcast(b_f) over the batch."""
    o_ref[...] = jnp.broadcast_to(bf_ref[...], (batch_pad, out_pad)).astype(o_ref.dtype)


# ------------------------- Params / one-time packing ------------------------ #

def init_params(key, input_size, hidden_size, output_size, num_layers):
    """Deterministic standard-normal init mirroring torch.randn shapes (out, in)."""
    params = {"layers": []}
    in_f = input_size
    for _ in range(num_layers):
        key, kw, kb = jax.random.split(key, 3)
        params["layers"].append(
            (jax.random.normal(kw, (hidden_size, in_f), jnp.float32),
             jax.random.normal(kb, (hidden_size,), jnp.float32)))
        in_f = hidden_size
    key, kw, kb = jax.random.split(key, 3)
    params["final"] = (
        jax.random.normal(kw, (output_size, hidden_size), jnp.float32),
        jax.random.normal(kb, (output_size,), jnp.float32))
    return params


def pack_params(params, input_size, hidden_size, output_size):
    """One-time pre-pack: transpose weights to (Fin, Fout), zero-pad feature dims
    to multiples of 128 lanes, pre-shape biases to (1, Fout_pad).  Zero padding is
    exact: padded input lanes hit zero weight rows; padded output lanes get zero
    weight columns and zero bias, and stay zero through the ReLU stack."""
    in_pad = _round_up(input_size, LANE)
    hid_pad = _round_up(hidden_size, LANE)
    out_pad = _round_up(output_size, LANE)

    def pack_linear(w, b, fin_pad, fout_pad):
        fout, fin = w.shape
        wt = jnp.zeros((fin_pad, fout_pad), w.dtype).at[:fin, :fout].set(w.T)
        bp = jnp.zeros((1, fout_pad), b.dtype).at[0, :fout].set(b)
        return wt, bp

    layers = []
    fin_pad = in_pad
    for (w, b) in params["layers"]:
        layers.append(pack_linear(w, b, fin_pad, hid_pad))
        fin_pad = hid_pad
    final = pack_linear(params["final"][0], params["final"][1], hid_pad, out_pad)
    return {"layers": layers, "final": final,
            "in_pad": in_pad, "hid_pad": hid_pad, "out_pad": out_pad}


# --------------------------- Model (forward pass) --------------------------- #

def fcuda_cpu_algorithm_forward(packed, x, output_size, *, elide_dead_work=False):
    B, fin = x.shape
    batch_pad = _round_up(max(B, SUBLANE), SUBLANE)
    in_pad, hid_pad, out_pad = packed["in_pad"], packed["hid_pad"], packed["out_pad"]

    vmem = pl.BlockSpec(memory_space=pltpu.MemorySpace.VMEM)
    out_shape = jax.ShapeDtypeStruct((batch_pad, out_pad), x.dtype)

    if elide_dead_work:
        # MemoryPooling zeroes the activations, so the result is just b_f broadcast.
        kernel = functools.partial(
            _final_bias_kernel, batch_pad=batch_pad, out_pad=out_pad)
        out = pl.pallas_call(
            kernel, out_shape=out_shape,
            in_specs=[vmem], out_specs=vmem,
        )(packed["final"][1])
    else:
        x_pad = jnp.zeros((batch_pad, in_pad), x.dtype).at[:B, :fin].set(x)
        num_layers = len(packed["layers"])
        args = [x_pad]
        for w, b in packed["layers"]:
            args += [w, b]
        args += [packed["final"][0], packed["final"][1]]
        kernel = functools.partial(
            _fused_mlp_kernel, num_layers=num_layers,
            batch_pad=batch_pad, hidden_pad=hid_pad)
        out = pl.pallas_call(
            kernel, out_shape=out_shape,
            in_specs=[vmem] * len(args), out_specs=vmem,
        )(*args)

    # TODO(synk): torch multiprocessing / DataLoader worker parallelism has no
    # Pallas equivalent (pure orchestration, math unchanged).  At scaled shapes,
    # add a batch grid axis with dimension_semantics=("parallel",) (v7x: 2 TCs,
    # 64 MiB VMEM) and bf16 matmul operands (v6e 256-wide MXU).
    return out[:B, :output_size]


# ---------------------------------- main ----------------------------------- #

if __name__ == "__main__":
    input_size, hidden_size, output_size = 32, 32, 16
    num_layers = 2
    batch = 8

    key = jax.random.PRNGKey(0)
    key, k_in = jax.random.split(key)
    params = init_params(key, input_size, hidden_size, output_size, num_layers)
    packed = pack_params(params, input_size, hidden_size, output_size)
    x = jax.random.normal(k_in, (batch, input_size), jnp.float32)

    # Full-fidelity fused kernel (hidden stack computed in-kernel, then discarded
    # by MemoryPooling) and the dead-work-elided fast path.
    out_full = jax.block_until_ready(
        fcuda_cpu_algorithm_forward(packed, x, output_size, elide_dead_work=False))
    out_fast = jax.block_until_ready(
        fcuda_cpu_algorithm_forward(packed, x, output_size, elide_dead_work=True))

    # Reference: after MemoryPooling, output = zeros @ W_f.T + b_f = b_f broadcast.
    ref = jnp.broadcast_to(params["final"][1], (batch, output_size))
    assert out_full.shape == (batch, output_size)
    assert out_fast.shape == (batch, output_size)
    assert jnp.allclose(out_full, ref, atol=1e-6), "fused kernel mismatch vs reference"
    assert jnp.allclose(out_fast, ref, atol=1e-6), "elided kernel mismatch vs reference"

    print("KERNEL_OK")
</pallas_src>

<mosaic_0001>
module attributes {stable_mosaic.version = 11 : i64} {
  func.func @_fused_mlp_kernel(%arg0: memref<8x128xf32, #tpu.memory_space<vmem>>, %arg1: memref<128x128xf32, #tpu.memory_space<vmem>>, %arg2: memref<1x128xf32, #tpu.memory_space<vmem>>, %arg3: memref<128x128xf32, #tpu.memory_space<vmem>>, %arg4: memref<1x128xf32, #tpu.memory_space<vmem>>, %arg5: memref<128x128xf32, #tpu.memory_space<vmem>>, %arg6: memref<1x128xf32, #tpu.memory_space<vmem>>, %arg7: memref<8x128xf32, #tpu.memory_space<vmem>>) attributes {dimension_semantics = [], scalar_prefetch = 0 : i64, scratch_operands = 0 : i64, tpu.core_type = #tpu.core_type<tc>} {
    %cst = arith.constant 0.000000e+00 : f32
    %0 = vector.broadcast %cst : f32 to vector<8x128xf32>
    %c0 = arith.constant 0 : index
    %c0_0 = arith.constant 0 : index
    %1 = vector.load %arg5[%c0, %c0_0] : memref<128x128xf32, #tpu.memory_space<vmem>>, vector<128x128xf32>
    %cst_1 = arith.constant dense<0.000000e+00> : vector<8x128xf32>
    %2 = tpu.matmul %0, %1, %cst_1 {dimension_numbers = #tpu.dot_dimension_numbers<[1], [0], [0], [1], [0, 0, 1, 1], [], []>} : vector<8x128xf32>, vector<128x128xf32>, vector<8x128xf32> -> vector<8x128xf32>
    %c0_2 = arith.constant 0 : index
    %c0_3 = arith.constant 0 : index
    %3 = vector.load %arg6[%c0_2, %c0_3] : memref<1x128xf32, #tpu.memory_space<vmem>>, vector<1x128xf32>
    %4 = vector.broadcast %3 : vector<1x128xf32> to vector<8x128xf32>
    %5 = arith.addf %2, %4 : vector<8x128xf32>
    %c0_4 = arith.constant 0 : index
    %c0_5 = arith.constant 0 : index
    %6 = vector.load %arg7[%c0_4, %c0_5] : memref<8x128xf32, #tpu.memory_space<vmem>>, vector<8x128xf32>
    tpu.vector_store %arg7[%c0_4, %c0_5], %5 {strides = array<i32>} : memref<8x128xf32, #tpu.memory_space<vmem>>, vector<8x128xf32>,
    return
  }
}

</mosaic_0001>

<llo_original>
// kernel: tpu_custom_call.1
$region0: #{tpu_custom_call.1}
  #allocation0 [shape = 'u32[]', space=smem, size = 0x4, offset = 0x4, fixed_abs, tag = 'smem constant byte address 0x4 - core index']
  #allocation1 [shape = 'u32[72,128]{1,0:T(1,128)}', space=vmem, size = 0x9000, scoped, tag = 'internal scratch']
  %s0 = inlined_call_operand.hbm [shape: f32[8,128], index: 0, kind: input, shape index: {}]
  %s1 = inlined_call_operand.hbm [shape: f32[128,128], index: 1, kind: input, shape index: {}]
  %s2 = inlined_call_operand.vmem [shape: f32[1,128], index: 2, kind: input, shape index: {}]
  %s3 = inlined_call_operand.hbm [shape: f32[128,128], index: 3, kind: input, shape index: {}]
  %s4 = inlined_call_operand.vmem [shape: f32[1,128], index: 4, kind: input, shape index: {}]
  %s5 = inlined_call_operand.hbm [shape: f32[128,128], index: 5, kind: input, shape index: {}]
  %s6 = inlined_call_operand.vmem [shape: f32[1,128], index: 6, kind: input, shape index: {}]
  %s7 = inlined_call_operand.hbm [shape: f32[8,128], index: 7, kind: output, shape index: {}]
  %s8 = sld [smem:[#allocation0]]
  $region54: #{tpu_custom_call.1} parent=0
    _
  %s10 = ssub.s32 1, %s8
  %s11 = scalar_select 0, %s10, %s8
  $region1: #{tpu_custom_call.1} parent=0
    #allocation2 [shape = 'u8[4096]{0}', space=vmem, size = 0x1000, scoped, tag = 'input window, operand 0, single buffered']
    #allocation3 [shape = 's32[1]{0}', space=sflag, size = 0x4, scoped, tag = 'scoped memory for tpu_custom_call.1']
    #allocation4 [shape = 's32[1]{0}', space=sflag, size = 0x4, scoped, tag = 'scoped memory for tpu_custom_call.1']
    #allocation5 [shape = 'u8[65536]{0}', space=vmem, size = 0x10000, scoped, tag = 'input window, operand 1, single buffered']
    #allocation6 [shape = 's32[1]{0}', space=sflag, size = 0x4, scoped, tag = 'scoped memory for tpu_custom_call.1']
    #allocation7 [shape = 'u8[65536]{0}', space=vmem, size = 0x10000, scoped, tag = 'input window, operand 3, single buffered']
    #allocation8 [shape = 'u8[65536]{0}', space=vmem, size = 0x10000, scoped, tag = 'input window, operand 5, single buffered']
    #allocation9 [shape = 's32[1]{0}', space=sflag, size = 0x4, scoped, tag = 'scoped memory for tpu_custom_call.1']
    #allocation10 [shape = 'u8[4096]{0}', space=vmem, size = 0x1000, scoped, tag = 'output window, operand 0, single buffered']
    %12 = vsyncpa [#allocation3], 0
    %13 = vsyncpa [#allocation6], 0
    %14 = vsyncpa [#allocation9], 0
    %15 = vsyncpa [#allocation4], 0
    // Predicated region
    $region2: #{tpu_custom_call.1} parent=1 // pred_check
      _
    $region3: #{tpu_custom_call.1} parent=1 // pred_check_branch
      %17 = sbr.rel (0) target = $region5
    $region4: #{tpu_custom_call.1} parent=1 // pred_region
      %19 = vsyncadd [#allocation3], 0
      %s21 = sshll.u32 %s0, 4
      %s22 = int_to_ptr.hbm [resolvable:$true] %s21
      %s23 = sshll.u32 [#allocation2], 4
      %s24 = int_to_ptr.vmem [resolvable:$true] %s23
      %26 = dma.hbm_to_vmem [thread:$0]  %s22, 128, %s24, [#allocation3]
    $region5: #{tpu_custom_call.1} parent=1 // pred_fallthru
      _
    // Predicated region
    $region6: #{tpu_custom_call.1} parent=1 // pred_check
      _
    $region7: #{tpu_custom_call.1} parent=1 // pred_check_branch
      %28 = sbr.rel (0) target = $region9
    $region8: #{tpu_custom_call.1} parent=1 // pred_region
      %30 = vsyncadd [#allocation6], 0
      %s31 = sshll.u32 %s1, 4
      %s32 = int_to_ptr.hbm [resolvable:$true] %s31
      %s33 = sshll.u32 [#allocation5], 4
      %s34 = int_to_ptr.vmem [resolvable:$true] %s33
      %39 = dma.hbm_to_vmem [thread:$0]  %s32, 2048, %s34, [#allocation6], 128, 128, 8
    $region9: #{tpu_custom_call.1} parent=1 // pred_fallthru
      _
    // Predicated region
    $region10: #{tpu_custom_call.1} parent=1 // pred_check
      _
    $region11: #{tpu_custom_call.1} parent=1 // pred_check_branch
      %41 = sbr.rel (0) target = $region13
    $region12: #{tpu_custom_call.1} parent=1 // pred_region
      _
    $region13: #{tpu_custom_call.1} parent=1 // pred_fallthru
      _
    // Predicated region
    $region14: #{tpu_custom_call.1} parent=1 // pred_check
      _
    $region15: #{tpu_custom_call.1} parent=1 // pred_check_branch
      %43 = sbr.rel (0) target = $region17
    $region16: #{tpu_custom_call.1} parent=1 // pred_region
      %45 = vsyncadd [#allocation6], 0
      %s46 = sshll.u32 %s3, 4
      %s47 = int_to_ptr.hbm [resolvable:$true] %s46
      %s48 = sshll.u32 [#allocation7], 4
      %s49 = int_to_ptr.vmem [resolvable:$true] %s48
      %54 = dma.hbm_to_vmem [thread:$0]  %s47, 2048, %s49, [#allocation6], 128, 128, 8
    $region17: #{tpu_custom_call.1} parent=1 // pred_fallthru
      _
    // Predicated region
    $region18: #{tpu_custom_call.1} parent=1 // pred_check
      _
    $region19: #{tpu_custom_call.1} parent=1 // pred_check_branch
      %56 = sbr.rel (0) target = $region21
    $region20: #{tpu_custom_call.1} parent=1 // pred_region
      _
    $region21: #{tpu_custom_call.1} parent=1 // pred_fallthru
      _
    // Predicated region
    $region22: #{tpu_custom_call.1} parent=1 // pred_check
      _
    $region23: #{tpu_custom_call.1} parent=1 // pred_check_branch
      %58 = sbr.rel (0) target = $region25
    $region24: #{tpu_custom_call.1} parent=1 // pred_region
      %60 = vsyncadd [#allocation9], 0
      %s61 = sshll.u32 %s5, 4
      %s62 = int_to_ptr.hbm [resolvable:$true] %s61
      %s63 = sshll.u32 [#allocation8], 4
      %s64 = int_to_ptr.vmem [resolvable:$true] %s63
      %69 = dma.hbm_to_vmem [thread:$0]  %s62, 2048, %s64, [#allocation9], 128, 128, 8
    $region25: #{tpu_custom_call.1} parent=1 // pred_fallthru
      _
    // Predicated region
    $region26: #{tpu_custom_call.1} parent=1 // pred_check
      _
    $region27: #{tpu_custom_call.1} parent=1 // pred_check_branch
      %71 = sbr.rel (0) target = $region29
    $region28: #{tpu_custom_call.1} parent=1 // pred_region
      _
    $region29: #{tpu_custom_call.1} parent=1 // pred_fallthru
      _
    // Predicated region
    $region30: #{tpu_custom_call.1} parent=1 // pred_check
      _
    $region31: #{tpu_custom_call.1} parent=1 // pred_check_branch
      %73 = sbr.rel (0) target = $region33
    $region32: #{tpu_custom_call.1} parent=1 // pred_region
      %75 = dma.done [#allocation3], 128
    $region33: #{tpu_custom_call.1} parent=1 // pred_fallthru
      _
    // Predicated region
    $region34: #{tpu_custom_call.1} parent=1 // pred_check
      _
    $region35: #{tpu_custom_call.1} parent=1 // pred_check_branch
      %77 = sbr.rel (0) target = $region37
    $region36: #{tpu_custom_call.1} parent=1 // pred_region
      %79 = dma.done [#allocation6], 2048
    $region37: #{tpu_custom_call.1} parent=1 // pred_fallthru
      _
    // Predicated region
    $region38: #{tpu_custom_call.1} parent=1 // pred_check
      _
    $region39: #{tpu_custom_call.1} parent=1 // pred_check_branch
      %81 = sbr.rel (0) target = $region41
    $region40: #{tpu_custom_call.1} parent=1 // pred_region
      %83 = dma.done [#allocation6], 2048
    $region41: #{tpu_custom_call.1} parent=1 // pred_fallthru
      _
    // Predicated region
    $region42: #{tpu_custom_call.1} parent=1 // pred_check
      _
    $region43: #{tpu_custom_call.1} parent=1 // pred_check_branch
      %85 = sbr.rel (0) target = $region45
    $region44: #{tpu_custom_call.1} parent=1 // pred_region
      %87 = dma.done [#allocation9], 2048
    $region45: #{tpu_custom_call.1} parent=1 // pred_fallthru
      _
    %v88 = vld [vmem:[#allocation8] sm:$0xff]
    %v89 = vld [vmem:[#allocation8 + $0x8] sm:$0xff]
    %v90 = vld [vmem:[#allocation8 + $0x10] sm:$0xff]
    %v91 = vld [vmem:[#allocation8 + $0x18] sm:$0xff]
    %v92 = vld [vmem:[#allocation8 + $0x20] sm:$0xff]
    %v93 = vld [vmem:[#allocation8 + $0x28] sm:$0xff]
    %v94 = vld [vmem:[#allocation8 + $0x30] sm:$0xff]
    %v95 = vld [vmem:[#allocation8 + $0x38] sm:$0xff]
    %v96 = vld [vmem:[#allocation8 + $0x40] sm:$0xff]
    %v97 = vld [vmem:[#allocation8 + $0x48] sm:$0xff]
    %v98 = vld [vmem:[#allocation8 + $0x50] sm:$0xff]
    %v99 = vld [vmem:[#allocation8 + $0x58] sm:$0xff]
    %v100 = vld [vmem:[#allocation8 + $0x60] sm:$0xff]
    %v101 = vld [vmem:[#allocation8 + $0x68] sm:$0xff]
    %v102 = vld [vmem:[#allocation8 + $0x70] sm:$0xff]
    %v103 = vld [vmem:[#allocation8 + $0x78] sm:$0xff]
    %v104 = vld [vmem:[%s6] sm:$0x1]
    %v106 = vperm.slane %v104, 0
    %108 = vmatpush.msra.mxu0 %v103
    %109 = vmatpush.msra.mxu0 %v102
    %110 = vmatpush.msra.mxu0 %v101
    %111 = vmatpush.msra.mxu0 %v100
    %112 = vmatpush.msra.mxu0 %v99
    %113 = vmatpush.msra.mxu0 %v98
    %114 = vmatpush.msra.mxu0 %v97
    %115 = vmatpush.msra.mxu0 %v96
    %116 = vmatpush.msra.mxu0 %v95
    %117 = vmatpush.msra.mxu0 %v94
    %118 = vmatpush.msra.mxu0 %v93
    %119 = vmatpush.msra.mxu0 %v92
    %120 = vmatpush.msra.mxu0 %v91
    %121 = vmatpush.msra.mxu0 %v90
    %122 = vmatpush.msra.mxu0 %v89
    %123 = vmatpush.msra.mxu0 %v88
    %124 = vmatmul.f32.gmra.mxu0 0.0
    %v125 = vpop.f32.mrf.mxu0
    %v126 = vadd.f32 %v106, %v125
    %127 = vdwg.mxu0
    %128 = vst [vmem:[#allocation10] sm:$0xff] %v126
    // Predicated region
    $region46: #{tpu_custom_call.1} parent=1 // pred_check
      _
    $region47: #{tpu_custom_call.1} parent=1 // pred_check_branch
      %130 = sbr.rel (0) target = $region49
    $region48: #{tpu_custom_call.1} parent=1 // pred_region
      %132 = vsyncadd [#allocation4], 0
      %s134 = sshll.u32 [#allocation10], 4
      %s135 = int_to_ptr.vmem [resolvable:$true] %s134
      %s136 = sshll.u32 %s7, 4
      %s137 = int_to_ptr.hbm [resolvable:$true] %s136
      %139 = dma.vmem_to_hbm [thread:$0]  %s135, 128, %s137, [#allocation4]
    $region49: #{tpu_custom_call.1} parent=1 // pred_fallthru
      _
    // Predicated region
    $region50: #{tpu_custom_call.1} parent=1 // pred_check
      _
    $region51: #{tpu_custom_call.1} parent=1 // pred_check_branch
      %141 = sbr.rel (0) target = $region53
    $region52: #{tpu_custom_call.1} parent=1 // pred_region
      %143 = dma.done [#allocation4], 128
    $region53: #{tpu_custom_call.1} parent=1 // pred_fallthru
      _
    %144 = vsyncpa [#allocation3], 1
    %145 = vsyncpa [#allocation6], 1
    %146 = vsyncpa [#allocation9], 1
    %147 = vsyncpa [#allocation4], 1

</llo_original>
